<compile_context>
chip_gen: v5e
topology: v5e:2x2
jax: 0.10.0
libtpu: 0.0.40
codegen_flags: <defaults>
</compile_context>

<pallas_src>
import functools

import jax
import jax.numpy as jnp
from jax.experimental import pallas as pl
from jax.experimental.pallas import tpu as pltpu

_MIB = 1024 * 1024


# ----------------------------- small helpers ---------------------------------

def _round_up(x, m):
    return ((x + m - 1) // m) * m


def _vmem_capacity_bytes():
    try:
        return int(pltpu.get_tpu_info().vmem_capacity_bytes)
    except Exception:
        return 64 * _MIB  # conservative fallback = v7x per-core VMEM


def _num_tensorcores():
    # 2 TensorCores per device on v4/v5p (megacore) and v7x; 1 on v5e/v6e.
    try:
        kind = (getattr(jax.devices()[0], "device_kind", "") or "").lower()
    except Exception:
        return 1
    for tag in ("v7", "v5p", "v4"):
        if tag in kind:
            return 2
    return 1


def _gelu_f32(y, approx):
    if approx:
        # tanh approximation: transcendental goes to the (otherwise idle) EUP slot.
        c = jnp.float32(0.7978845608028654)  # sqrt(2/pi)
        return 0.5 * y * (1.0 + jnp.tanh(c * (y + jnp.float32(0.044715) * y * y * y)))
    # PyTorch nn.GELU(approximate='none'): 0.5*x*(1+erf(x/sqrt(2))) in f32.
    return 0.5 * y * (1.0 + jax.lax.erf(y * jnp.float32(0.7071067811865476)))


def _compiler_params(dims, est_vmem_bytes, cap):
    limit = int(max(32 * _MIB, min(2 * est_vmem_bytes + 8 * _MIB, int(0.9 * cap))))
    return pltpu.CompilerParams(dimension_semantics=dims, vmem_limit_bytes=limit)


# ------------------- path A: pointwise conv (k=1, s=1, p=0) ------------------

def _pointwise_kernel(w_ref, b_ref, x_ref, o_ref, *, approx):
    # w_ref: (Cout_p, Cin) compute dtype; b_ref: (Cout_p, 1) f32
    # x_ref: (1, Cin, ts) compute dtype;  o_ref: (1, Cout_p, ts)
    acc = jnp.dot(w_ref[...], x_ref[0, :, :], preferred_element_type=jnp.float32)
    y = acc + b_ref[...].astype(jnp.float32)
    o_ref[0, :, :] = _gelu_f32(y, approx).astype(o_ref.dtype)


def _pointwise_conv_bn_gelu(x3d, w, b, *, out_dtype, approx):
    """x3d: (N, Cin, HW); w: (Cout_p, Cin); b: (Cout_p, 1) f32 -> (N, Cout_p, HW)."""
    N, Cin, HW = x3d.shape
    Cout_p = w.shape[0]
    in_b = jnp.dtype(x3d.dtype).itemsize
    out_b = jnp.dtype(out_dtype).itemsize

    # Spatial (lane) tile: as large as the VMEM budget allows (mem-bound kernel).
    # Budget is deliberately conservative on 64 MiB parts (v7x).
    cap = _vmem_capacity_bytes()
    budget = int((0.45 if cap <= 64 * _MIB else 0.55) * cap)
    fixed = 2 * Cout_p * Cin * in_b + 2 * Cout_p * 128 * 4     # weight + bias buffers
    per_col = 2 * Cin * in_b + 2 * Cout_p * out_b              # x + out (dbl-buffered)
    ts = max(128, min((budget - fixed) // max(per_col, 1), 16384))
    ts = 128 * (ts // 128)
    if ts >= HW:
        ts = HW                                   # full spatial extent in one block
    # Split the spatial axis only when there are 2 TensorCores to feed; on 1-TC parts
    # (v5e/v6e) halving the lane tile only loses HBM-roofline utilization.
    if _num_tensorcores() >= 2 and N * pl.cdiv(HW, ts) < 2 and HW > 256:
        ts = 128 * pl.cdiv(pl.cdiv(HW, 2), 128)

    # NOTE: if HW % ts != 0 the ragged last tile is handled by the cdiv grid — Pallas
    # clips OOB reads and masks the store, so garbage columns never reach HBM.
    est = fixed + ts * per_col
    grid = (N, pl.cdiv(HW, ts))
    kern = functools.partial(_pointwise_kernel, approx=approx)
    return pl.pallas_call(
        kern,
        out_shape=jax.ShapeDtypeStruct((N, Cout_p, HW), out_dtype),
        grid_spec=pltpu.PrefetchScalarGridSpec(
            num_scalar_prefetch=0,
            grid=grid,
            in_specs=[
                pl.BlockSpec((Cout_p, Cin), lambda n, s: (0, 0)),    # fused weight
                pl.BlockSpec((Cout_p, 1), lambda n, s: (0, 0)),      # fused bias
                pl.BlockSpec((1, Cin, ts), lambda n, s: (n, 0, s)),  # input slab
            ],
            out_specs=pl.BlockSpec((1, Cout_p, ts), lambda n, s: (n, 0, s)),
        ),
        compiler_params=_compiler_params(("parallel", "parallel"), est, cap),
    )(w, b, x3d)


# ---------------- path B: general conv, direct (no-im2col) kernel -------------

def _direct_conv_kernel(w_ref, b_ref, x_ref, o_ref, *, k, stride, dilation,
                        Ho, Wo, approx):
    # w_ref: (k*k, Cin, Cout_p) compute dtype (fully resident in VMEM)
    # b_ref: (1, Cout_p) f32
    # x_ref: (1, Hp, Wp, Cin) padded image, compute dtype
    # o_ref: (1, Cout_p, Ho*Wo) out dtype (NCHW-native, spatial lane-dense)
    HW = Ho * Wo
    acc = None
    for i in range(k):           # static unroll over the k*k kernel positions
        for j in range(k):
            if stride == 1:
                win = x_ref[0, pl.ds(i * dilation, Ho), pl.ds(j * dilation, Wo), :]
            else:
                win = x_ref[0, pl.ds(i * dilation, Ho, stride),
                            pl.ds(j * dilation, Wo, stride), :]
            rhs = win.reshape(HW, -1)                       # (Ho*Wo, Cin), collapse-major
            part = jnp.dot(rhs, w_ref[i * k + j],
                           preferred_element_type=jnp.float32)   # (Ho*Wo, Cout_p)
            acc = part if acc is None else acc + part
    y = _gelu_f32(acc + b_ref[...].astype(jnp.float32), approx)
    o_ref[0, :, :] = y.T.astype(o_ref.dtype)                # lane-dense (Cout_p, Ho*Wo)


def _direct_conv_bn_gelu(x_p, w, b, *, k, stride, dilation, Ho, Wo, out_dtype, approx):
    """x_p: (N, Hp, Wp, Cin) padded; w: (k*k, Cin, Cout_p); b: (1, Cout_p) f32."""
    N, Hp, Wp, Cin = x_p.shape
    kk, _, Cout_p = w.shape
    HW = Ho * Wo
    in_b = jnp.dtype(x_p.dtype).itemsize
    out_b = jnp.dtype(out_dtype).itemsize

    cap = _vmem_capacity_bytes()
    # VMEM-tile-layout estimate (last dim padded to 128 lanes, second-minor to 8).
    x_tile = Hp * _round_up(Wp, 8) * _round_up(Cin, 128) * in_b
    o_tile = _round_up(Cout_p, 8) * _round_up(HW, 128) * out_b
    acc_tile = _round_up(HW, 8) * _round_up(Cout_p, 128) * 4
    w_tile = kk * _round_up(Cin, 8) * _round_up(Cout_p, 128) * in_b
    est = 2 * x_tile + 2 * o_tile + 3 * acc_tile + 2 * w_tile + Cout_p * 512
    # TODO(synk): images whose padded slab exceeds the VMEM budget need Ho/Cin tiling
    # with halo handling via manual make_async_copy instead of whole-image blocks.

    kern = functools.partial(_direct_conv_kernel, k=k, stride=stride,
                             dilation=dilation, Ho=Ho, Wo=Wo, approx=approx)
    return pl.pallas_call(
        kern,
        out_shape=jax.ShapeDtypeStruct((N, Cout_p, HW), out_dtype),
        grid_spec=pltpu.PrefetchScalarGridSpec(
            num_scalar_prefetch=0,
            grid=(N,),
            in_specs=[
                pl.BlockSpec((kk, Cin, Cout_p), lambda n: (0, 0, 0)),   # resident weight
                pl.BlockSpec((1, Cout_p), lambda n: (0, 0)),            # resident bias
                pl.BlockSpec((1, Hp, Wp, Cin), lambda n: (n, 0, 0, 0)),  # one padded image
            ],
            out_specs=pl.BlockSpec((1, Cout_p, HW), lambda n: (n, 0, 0)),
        ),
        compiler_params=_compiler_params(("parallel",), est, cap),
    )(w, b, x_p)


# --------------------------------- module -------------------------------------

class ConvBNLayerPallas:
    """Mirror of ConvBNLayer: Conv2d(k,s,p,d, bias) + BatchNorm2d(eval) + GELU.

    compute_dtype: MXU input dtype (bf16 default; pass f32 for bit-closer numerics —
                   an explicit, documented accuracy/throughput knob).
    out_dtype:     store dtype (f32 default to match PyTorch; bf16 halves output HBM
                   bytes — recommended on v5e when the consumer tolerates it).
    gelu_approx:   tanh-approx GELU instead of exact erf (opt-in, numerics-affecting).
    """

    def __init__(self, in_channels, out_channels, kernel_size=1, stride=1,
                 padding=0, dilation=1, bias=False, act="GELU",
                 key=None, dtype=jnp.float32, compute_dtype=jnp.bfloat16,
                 out_dtype=jnp.float32, gelu_approx=False):
        assert act == "GELU"
        self.k, self.stride, self.padding, self.dilation = (
            kernel_size, stride, padding, dilation)
        self.cin, self.cout = in_channels, out_channels
        self.compute_dtype, self.out_dtype = compute_dtype, out_dtype
        self.gelu_approx = gelu_approx

        if key is None:
            key = jax.random.PRNGKey(0)
        k_w, k_cb, k_g, k_b, k_m, k_v = jax.random.split(key, 6)

        fan_in = in_channels * kernel_size * kernel_size
        bound = 1.0 / (fan_in ** 0.5)
        self.weight = jax.random.uniform(
            k_w, (out_channels, in_channels, kernel_size, kernel_size),
            minval=-bound, maxval=bound, dtype=dtype)
        self.conv_bias = (jax.random.uniform(k_cb, (out_channels,), dtype=dtype,
                                             minval=-bound, maxval=bound)
                          if bias else jnp.zeros((out_channels,), dtype))

        # BatchNorm2d params + running stats (inference semantics).
        self.gamma = 1.0 + 0.1 * jax.random.normal(k_g, (out_channels,), dtype)
        self.beta = 0.1 * jax.random.normal(k_b, (out_channels,), dtype)
        self.running_mean = 0.1 * jax.random.normal(k_m, (out_channels,), dtype)
        self.running_var = jnp.abs(
            1.0 + 0.1 * jax.random.normal(k_v, (out_channels,), dtype))
        self.eps = 1e-5

        # ---- fuse BN into the conv (same math as _fuse_bn_tensor) ----
        scale = self.gamma / jnp.sqrt(self.running_var + self.eps)       # (Cout,)
        w_fused = self.weight * scale[:, None, None, None]               # (Cout,Cin,kh,kw)
        b_fused = self.beta - (self.running_mean - self.conv_bias) * scale

        # Cout padded only to a sublane multiple (8): NCHW-native output on both paths.
        self.cout_p = _round_up(out_channels, 8)
        self._pointwise = (kernel_size == 1 and stride == 1 and padding == 0)
        if self._pointwise:
            w_pw = jnp.zeros((self.cout_p, in_channels), jnp.float32)
            w_pw = w_pw.at[:out_channels].set(w_fused[:, :, 0, 0].astype(jnp.float32))
            self.w_pw = w_pw.astype(compute_dtype)
            b_pw = jnp.zeros((self.cout_p, 1), jnp.float32)
            self.b_pw = b_pw.at[:out_channels, 0].set(b_fused.astype(jnp.float32))
        else:
            # (Cout,Cin,kh,kw) -> (kh*kw, Cin, Cout_p); whole weight stays VMEM-resident.
            kk = kernel_size * kernel_size
            w_dir = jnp.transpose(w_fused, (2, 3, 1, 0)).reshape(
                kk, in_channels, out_channels)
            w_dir = jnp.pad(w_dir.astype(jnp.float32),
                            ((0, 0), (0, 0), (0, self.cout_p - out_channels)))
            self.w_dir = w_dir.astype(compute_dtype)
            self.b_dir = jnp.pad(
                b_fused.astype(jnp.float32).reshape(1, out_channels),
                ((0, 0), (0, self.cout_p - out_channels)))

    @functools.partial(jax.jit, static_argnums=0)
    def __call__(self, x_nchw):
        # x_nchw: (N, Cin, H, W) -> (N, Cout, Ho, Wo)
        N, Cin, H, W = x_nchw.shape
        assert Cin == self.cin

        if self._pointwise:
            # NCHW-native: spatial stays in the lane dim; no transposes anywhere.
            x3d = x_nchw.reshape(N, Cin, H * W).astype(self.compute_dtype)
            out = _pointwise_conv_bn_gelu(x3d, self.w_pw, self.b_pw,
                                          out_dtype=self.out_dtype,
                                          approx=self.gelu_approx)
            return out[:, :self.cout, :].reshape(N, self.cout, H, W)

        # General conv: direct (no-im2col) kernel.  Wrapper only transposes to NHWC
        # and pads the halo (~1x input traffic, fused by XLA); the k^2 window gather
        # and the Cin contraction happen inside the kernel.
        # TODO(synk): read NCHW directly (in-kernel relayout) to drop this transpose.
        p, d, s, k = self.padding, self.dilation, self.stride, self.k
        x_p = jnp.pad(jnp.transpose(x_nchw, (0, 2, 3, 1)),
                      ((0, 0), (p, p), (p, p), (0, 0))).astype(self.compute_dtype)
        Hp, Wp = H + 2 * p, W + 2 * p
        eff_k = d * (k - 1) + 1
        Ho, Wo = (Hp - eff_k) // s + 1, (Wp - eff_k) // s + 1
        out = _direct_conv_bn_gelu(x_p, self.w_dir, self.b_dir, k=k, stride=s,
                                   dilation=d, Ho=Ho, Wo=Wo,
                                   out_dtype=self.out_dtype, approx=self.gelu_approx)
        # Slice is a no-op when Cout % 8 == 0; the reshape is a free contiguous view.
        return out[:, :self.cout, :].reshape(N, self.cout, Ho, Wo)


# ------------------------------- reference ------------------------------------

def _reference_forward(layer, x_nchw):
    """Pure-JAX (XLA) reference: conv + BN(eval) + exact GELU, all in f32."""
    y = jax.lax.conv_general_dilated(
        x_nchw.astype(jnp.float32), layer.weight.astype(jnp.float32),
        window_strides=(layer.stride, layer.stride),
        padding=[(layer.padding, layer.padding)] * 2,
        rhs_dilation=(layer.dilation, layer.dilation),
        dimension_numbers=("NCHW", "OIHW", "NCHW"))
    y = y + layer.conv_bias[None, :, None, None]
    scale = (layer.gamma / jnp.sqrt(layer.running_var + layer.eps))[None, :, None, None]
    y = (y - layer.running_mean[None, :, None, None]) * scale + layer.beta[None, :, None, None]
    return _gelu_f32(y, approx=False)


# --------------------------------- main ----------------------------------------

if __name__ == "__main__":
    key = jax.random.PRNGKey(0)
    k_x, k_p1, k_p2 = jax.random.split(key, 3)

    N, Cin, H, W, Cout = 2, 4, 16, 16, 8
    x = jax.random.normal(k_x, (N, Cin, H, W), jnp.float32)

    # Case 1: module defaults (1x1 conv) -> pointwise NCHW path.
    layer = ConvBNLayerPallas(Cin, Cout, kernel_size=1, stride=1, padding=0,
                              dilation=1, bias=False, act="GELU", key=k_p1)
    y = jax.block_until_ready(layer(x))
    assert y.shape == (N, Cout, H, W), y.shape
    y_ref = _reference_forward(layer, x)
    assert jnp.allclose(y, y_ref, atol=5e-2, rtol=5e-2), \
        float(jnp.max(jnp.abs(y - y_ref)))

    # Case 2: 3x3 conv, padding=1 -> direct (no-im2col) conv path.
    layer3 = ConvBNLayerPallas(Cin, Cout, kernel_size=3, stride=1, padding=1,
                               dilation=1, bias=False, act="GELU", key=k_p2)
    y3 = jax.block_until_ready(layer3(x))
    assert y3.shape == (N, Cout, H, W), y3.shape
    y3_ref = _reference_forward(layer3, x)
    assert jnp.allclose(y3, y3_ref, atol=5e-2, rtol=5e-2), \
        float(jnp.max(jnp.abs(y3 - y3_ref)))

    print("KERNEL_OK")
</pallas_src>

<mosaic_0001>
module attributes {stable_mosaic.version = 11 : i64} {
  func.func @_pointwise_kernel(%arg0: i32, %arg1: i32, %arg2: memref<8x4xbf16, #tpu.memory_space<vmem>>, %arg3: memref<8x1xf32, #tpu.memory_space<vmem>>, %arg4: memref<1x4x256xbf16, #tpu.memory_space<vmem>>, %arg5: memref<1x8x256xf32, #tpu.memory_space<vmem>>) attributes {dimension_semantics = [#tpu.dimension_semantics<parallel>, #tpu.dimension_semantics<parallel>], iteration_bounds = array<i64: 2, 1>, scalar_prefetch = 0 : i64, scratch_operands = 0 : i64, tpu.core_type = #tpu.core_type<tc>, window_params = [{pipeline_mode = #tpu.pipeline_mode<synchronous>, transform_indices = @transform_0, window_bounds = array<i64: 8, 4>}, {pipeline_mode = #tpu.pipeline_mode<synchronous>, transform_indices = @transform_1, window_bounds = array<i64: 8, 1>}, {transform_indices = @transform_2, window_bounds = array<i64: 1, 4, 256>}, {transform_indices = @transform_3, window_bounds = array<i64: 1, 8, 256>}]} {
    %c0 = arith.constant 0 : index
    %c0_0 = arith.constant 0 : index
    %0 = vector.load %arg2[%c0, %c0_0] : memref<8x4xbf16, #tpu.memory_space<vmem>>, vector<8x4xbf16>
    %c0_1 = arith.constant 0 : index
    %c0_2 = arith.constant 0 : index
    %c0_3 = arith.constant 0 : index
    %1 = vector.load %arg4[%c0_1, %c0_2, %c0_3] : memref<1x4x256xbf16, #tpu.memory_space<vmem>>, vector<1x4x256xbf16>
    %2 = vector.shape_cast %1 : vector<1x4x256xbf16> to vector<4x256xbf16>
    %cst = arith.constant dense<0.000000e+00> : vector<8x256xf32>
    %3 = tpu.matmul %0, %2, %cst {dimension_numbers = #tpu.dot_dimension_numbers<[1], [0], [0], [1], [0, 0, 1, 1], [], []>} : vector<8x4xbf16>, vector<4x256xbf16>, vector<8x256xf32> -> vector<8x256xf32>
    %c0_4 = arith.constant 0 : index
    %c0_5 = arith.constant 0 : index
    %4 = vector.load %arg3[%c0_4, %c0_5] : memref<8x1xf32, #tpu.memory_space<vmem>>, vector<8x1xf32>
    %5 = vector.broadcast %4 : vector<8x1xf32> to vector<8x256xf32>
    %6 = arith.addf %3, %5 : vector<8x256xf32>
    %cst_6 = arith.constant 5.000000e-01 : f32
    %7 = vector.broadcast %cst_6 : f32 to vector<8x256xf32>
    %8 = arith.mulf %7, %6 : vector<8x256xf32>
    %cst_7 = arith.constant 0.707106769 : f32
    %9 = vector.broadcast %cst_7 : f32 to vector<8x256xf32>
    %10 = arith.mulf %6, %9 : vector<8x256xf32>
    %11 = math.erf %10 : vector<8x256xf32>
    %cst_8 = arith.constant 1.000000e+00 : f32
    %12 = vector.broadcast %cst_8 : f32 to vector<8x256xf32>
    %13 = arith.addf %12, %11 : vector<8x256xf32>
    %14 = arith.mulf %8, %13 : vector<8x256xf32>
    %c0_9 = arith.constant 0 : index
    %c0_10 = arith.constant 0 : index
    %c0_11 = arith.constant 0 : index
    %15 = vector.load %arg5[%c0_9, %c0_10, %c0_11] : memref<1x8x256xf32, #tpu.memory_space<vmem>>, vector<1x8x256xf32>
    %16 = vector.shape_cast %15 : vector<1x8x256xf32> to vector<8x256xf32>
    %17 = vector.shape_cast %14 : vector<8x256xf32> to vector<1x8x256xf32>
    tpu.vector_store %arg5[%c0_9, %c0_10, %c0_11], %17 {strides = array<i32>} : memref<1x8x256xf32, #tpu.memory_space<vmem>>, vector<1x8x256xf32>,
    return
  }
  func.func @transform_0(%arg0: i32, %arg1: i32) -> (i32, i32) {
    %c0_i32 = arith.constant 0 : i32
    %c0_i32_0 = arith.constant 0 : i32
    %c0_i32_1 = arith.constant 0 : i32
    return %c0_i32, %c0_i32_0 : i32, i32
  }
  func.func @transform_1(%arg0: i32, %arg1: i32) -> (i32, i32) {
    %c0_i32 = arith.constant 0 : i32
    %c0_i32_0 = arith.constant 0 : i32
    %c0_i32_1 = arith.constant 0 : i32
    return %c0_i32, %c0_i32_0 : i32, i32
  }
  func.func @transform_2(%arg0: i32, %arg1: i32) -> (i32, i32, i32) {
    %c0_i32 = arith.constant 0 : i32
    %c0_i32_0 = arith.constant 0 : i32
    return %arg0, %c0_i32, %arg1 : i32, i32, i32
  }
  func.func @transform_3(%arg0: i32, %arg1: i32) -> (i32, i32, i32) {
    %c0_i32 = arith.constant 0 : i32
    %c0_i32_0 = arith.constant 0 : i32
    return %arg0, %c0_i32, %arg1 : i32, i32, i32
  }
}

</mosaic_0001>

<llo_original>
// kernel: a_call__.1
$region0: #{a_call__.1}
  #allocation0 [shape = 'u32[]', space=smem, size = 0x4, offset = 0x4, fixed_abs, tag = 'smem constant byte address 0x4 - core index']
  #allocation1 [shape = 'u32[72,128]{1,0:T(1,128)}', space=vmem, size = 0x9000, scoped, tag = 'internal scratch']
  %s0 = inlined_call_operand.vmem [shape: bf16[8,4], index: 0, kind: input, shape index: {}]
  %s1 = inlined_call_operand.vmem [shape: f32[8,1], index: 1, kind: input, shape index: {}]
  %s2 = inlined_call_operand.vmem [shape: bf16[2,4,256], index: 2, kind: input, shape index: {}]
  %s3 = inlined_call_operand.vmem [shape: f32[2,8,256], index: 3, kind: output, shape index: {}]
  %s4 = sld [smem:[#allocation0]]
  $region45: #{a_call__.1} parent=0
    _
  %s6 = ssub.s32 1, %s4
  %s7 = scalar_select 0, %s6, %s4
  loop: start=0, step=1, limit=4
  $region2: #{a_call__.1} parent=0 // loop_pre_header
    _
  $region3: #{a_call__.1} parent=0 // loop_header
    %s9 = sphi 0, %s13
    %p10 = scmp.ge.s32.totalorder %s9, 4
    %s16 = sphi 0, %s28
    %s17 = sphi 0, %s24
    %s18 = sphi 0, %s16
    %s19 = sphi 0, %s17
    %s20 = sphi 0, %s18
    %s21 = sphi 0, %s19
    %s29 = sphi 0, %s29
    %s31 = sphi 0, %s29
    %s32 = sphi 0, %s31
    %s46 = sphi 0, %s32
    %s50 = sphi 0, %s50
    %s52 = sphi 0, %s50
    %s53 = sphi 0, %s52
    %s67 = sphi 0, %s53
    %s75 = sphi 0, %s77
    %s78 = sphi 0, %s75
    %s79 = sphi 0, %s78
    %s95 = sphi 0, %s79
    %s103 = sphi 0, %s105
    %s106 = sphi 0, %s103
    %s107 = sphi 0, %s106
    %s123 = sphi 0, %s107
  $region4: #{a_call__.1} parent=0 // loop_header_branch
    %12 = sbr.rel (%p10) target = $region8
  $region5: #{a_call__.1} parent=0 // loop_body
    %s14 = ssub.s32 %s9, 1
    %s15 = ssub.s32 %s9, 2
    %s22 = sadd.s32 1, %s17
    %p23 = scmp.ge.s32.totalorder %s22, 1
    %s24 = scalar_select %p23, 0, %s22
    %s25 = sadd.s32 1, %s16
    %s26 = scalar_select %p23, %s25, %s16
    %p27 = scmp.ge.s32.totalorder %s26, 2
    %s28 = scalar_select %p27, 0, %s26
    %s30 = sadd.s32 %s29, 1
    %p33 = scmp.eq.s32.totalorder %s9, 1
    %p34 = scmp.ne.s32.totalorder %s29, %s31
    %p35 = scmp.eq.s32.totalorder %s9, 0
    %p36 = por %p34, %p35
    %p37 = scmp.ne.s32.totalorder %s29, %s31
    %p38 = scmp.eq.s32.totalorder %s14, 1
    %p39 = por %p37, %p38
    %p40 = scmp.ne.s32.totalorder %s31, %s32
    %p41 = scmp.eq.s32.totalorder %s14, 0
    %p42 = por %p40, %p41
    %p43 = scmp.ne.s32.totalorder %s31, %s32
    %p44 = scmp.eq.s32.totalorder %s15, 1
    %p45 = por %p43, %p44
    %p47 = scmp.ne.s32.totalorder %s32, %s46
    %p48 = scmp.eq.s32.totalorder %s15, 0
    %p49 = por %p47, %p48
    %s51 = sadd.s32 %s50, 1
    %p54 = scmp.eq.s32.totalorder %s9, 1
    %p55 = scmp.ne.s32.totalorder %s50, %s52
    %p56 = scmp.eq.s32.totalorder %s9, 0
    %p57 = por %p55, %p56
    %p58 = scmp.ne.s32.totalorder %s50, %s52
    %p59 = scmp.eq.s32.totalorder %s14, 1
    %p60 = por %p58, %p59
    %p61 = scmp.ne.s32.totalorder %s52, %s53
    %p62 = scmp.eq.s32.totalorder %s14, 0
    %p63 = por %p61, %p62
    %p64 = scmp.ne.s32.totalorder %s52, %s53
    %p65 = scmp.eq.s32.totalorder %s15, 1
    %p66 = por %p64, %p65
    %p68 = scmp.ne.s32.totalorder %s53, %s67
    %p69 = scmp.eq.s32.totalorder %s15, 0
    %p70 = por %p68, %p69
    %s71 = ssub.s32 %s16, %s28
    %s72 = ssub.s32 %s17, %s24
    %s73 = sor.u32 %s71, %s72
    %p74 = scmp.eq.s32.totalorder %s73, 0
    %s76 = sadd.s32 %s75, 1
    %s77 = scalar_select %p74, %s75, %s76
    %p80 = pneg %p74
    %p81 = scmp.eq.s32.totalorder %s9, 1
    %p82 = por %p80, %p81
    %p83 = scmp.ne.s32.totalorder %s75, %s78
    %p84 = scmp.eq.s32.totalorder %s9, 0
    %p85 = por %p83, %p84
    %p86 = scmp.ne.s32.totalorder %s75, %s78
    %p87 = scmp.eq.s32.totalorder %s14, 1
    %p88 = por %p86, %p87
    %p89 = scmp.ne.s32.totalorder %s78, %s79
    %p90 = scmp.eq.s32.totalorder %s14, 0
    %p91 = por %p89, %p90
    %p92 = scmp.ne.s32.totalorder %s78, %s79
    %p93 = scmp.eq.s32.totalorder %s15, 1
    %p94 = por %p92, %p93
    %p96 = scmp.ne.s32.totalorder %s79, %s95
    %p97 = scmp.eq.s32.totalorder %s15, 0
    %p98 = por %p96, %p97
    %s99 = ssub.s32 %s16, %s28
    %s100 = ssub.s32 %s17, %s24
    %s101 = sor.u32 %s99, %s100
    %p102 = scmp.eq.s32.totalorder %s101, 0
    %s104 = sadd.s32 %s103, 1
    %s105 = scalar_select %p102, %s103, %s104
    %p108 = pneg %p102
    %p109 = scmp.eq.s32.totalorder %s9, 1
    %p110 = por %p108, %p109
    %p111 = scmp.ne.s32.totalorder %s103, %s106
    %p112 = scmp.eq.s32.totalorder %s9, 0
    %p113 = por %p111, %p112
    %p114 = scmp.ne.s32.totalorder %s103, %s106
    %p115 = scmp.eq.s32.totalorder %s14, 1
    %p116 = por %p114, %p115
    %p117 = scmp.ne.s32.totalorder %s106, %s107
    %p118 = scmp.eq.s32.totalorder %s14, 0
    %p119 = por %p117, %p118
    %p120 = scmp.ne.s32.totalorder %s106, %s107
    %p121 = scmp.eq.s32.totalorder %s15, 1
    %p122 = por %p120, %p121
    %p124 = scmp.ne.s32.totalorder %s107, %s123
    %p125 = scmp.eq.s32.totalorder %s15, 0
    %p126 = por %p124, %p125
    %p127 = scmp.le.s32.totalorder 1, %s9
    %p128 = scmp.lt.s32.totalorder %s9, 3
    %p129 = pnand %p127, %p128
    %p130 = pneg %p129
    // Predicated region
    $region9: #{a_call__.1} parent=5 // pred_check
      _
    $region10: #{a_call__.1} parent=5 // pred_check_branch
      %132 = sbr.rel (%p129) target = $region12
    $region11: #{a_call__.1} parent=5 // pred_region
      %s133 = ssub.s32 %s9, 1
      // Predicated region
      $region13: #{a_call__.1} parent=11 // pred_check
        %p134 = pneg %p42
      $region14: #{a_call__.1} parent=11 // pred_check_branch
        %136 = sbr.rel (%p134) target = $region16
      $region15: #{a_call__.1} parent=11 // pred_region
        _
      $region16: #{a_call__.1} parent=11 // pred_fallthru
        _
      // Predicated region
      $region17: #{a_call__.1} parent=11 // pred_check
        %p137 = pneg %p63
      $region18: #{a_call__.1} parent=11 // pred_check_branch
        %139 = sbr.rel (%p137) target = $region20
      $region19: #{a_call__.1} parent=11 // pred_region
        _
      $region20: #{a_call__.1} parent=11 // pred_fallthru
        _
    $region12: #{a_call__.1} parent=5 // pred_fallthru
      _
    %p140 = scmp.lt.s32.totalorder %s9, 2
    // Predicated region
    $region21: #{a_call__.1} parent=5 // pred_check
      %p141 = pneg %p140
    $region22: #{a_call__.1} parent=5 // pred_check_branch
      %143 = sbr.rel (%p141) target = $region24
    $region23: #{a_call__.1} parent=5 // pred_region
      // Predicated region
      $region25: #{a_call__.1} parent=23 // pred_check
        %p144 = pneg %p85
      $region26: #{a_call__.1} parent=23 // pred_check_branch
        %146 = sbr.rel (%p144) target = $region28
      $region27: #{a_call__.1} parent=23 // pred_region
        %s147 = smul.u32 2, %s17
        %p148 = scmp.lt.s32.totalorder %s16, 1
        %s149 = scalar_select %p148, %s16, 1
        %p150 = scmp.lt.s32.totalorder %s147, 1
        %s151 = scalar_select %p150, %s147, 1
        %s152 = smul.addr %s149, 2
        %s153 = sadd.s32 %s151, %s152
        %s154 = smul.addr %s153, 2
        %s155 = scalar_lea.vmem %s2, %s154
        %s156 = smul.u32 2, %s17
      $region28: #{a_call__.1} parent=23 // pred_fallthru
        _
    $region24: #{a_call__.1} parent=5 // pred_fallthru
      _
    %p157 = scmp.le.s32.totalorder 1, %s9
    %p158 = scmp.lt.s32.totalorder %s9, 3
    %p159 = pnand %p157, %p158
    %p160 = pneg %p159
    // Predicated region
    $region29: #{a_call__.1} parent=5 // pred_check
      _
    $region30: #{a_call__.1} parent=5 // pred_check_branch
      %162 = sbr.rel (%p159) target = $region32
    $region31: #{a_call__.1} parent=5 // pred_region
      %s163 = ssub.s32 %s9, 1
      %p164 = pneg %p42
      %p165 = pneg %p39
      %p166 = pneg %p63
      %p167 = pneg %p60
      %s168 = smul.u32 2, %s19
      %p169 = scmp.lt.s32.totalorder %s18, 1
      %s170 = scalar_select %p169, %s18, 1
      %p171 = scmp.lt.s32.totalorder %s168, 1
      %s172 = scalar_select %p171, %s168, 1
      %s173 = smul.addr %s170, 2
      %s174 = sadd.s32 %s172, %s173
      %s175 = smul.addr %s174, 2
      %s176 = scalar_lea.vmem %s2, %s175
      %p177 = pneg %p91
      %p178 = pneg %p88
      %p179 = pneg %p119
      %p180 = pneg %p116
      %s181 = smul.u32 2, %s19
      %p182 = scmp.lt.s32.totalorder %s18, 1
      %s183 = scalar_select %p182, %s18, 1
      %p184 = scmp.lt.s32.totalorder %s181, 1
      %s185 = scalar_select %p184, %s181, 1
      %s186 = smul.addr %s183, 2
      %s187 = sadd.s32 %s185, %s186
      %s188 = smul.addr %s187, 8
      %s189 = scalar_lea.vmem %s3, %s188
      %s190 = smul.u32 2, %s19
      %p191 = scmp.lt.s32.totalorder %s18, 1
      %s192 = scalar_select %p191, %s18, 1
      %p193 = scmp.lt.s32.totalorder %s190, 1
      %s194 = scalar_select %p193, %s190, 1
      %s195 = smul.addr %s192, 2
      %s196 = sadd.s32 %s194, %s195
      %s197 = smul.addr %s196, 2
      %s198 = scalar_lea.vmem %s2, %s197
      %s199 = smul.u32 2, %s19
      %s200 = smul.u32 2, %s19
      %p201 = scmp.lt.s32.totalorder %s18, 1
      %s202 = scalar_select %p201, %s18, 1
      %p203 = scmp.lt.s32.totalorder %s200, 1
      %s204 = scalar_select %p203, %s200, 1
      %s205 = smul.addr %s202, 2
      %s206 = sadd.s32 %s204, %s205
      %s207 = smul.addr %s206, 8
      %s208 = scalar_lea.vmem %s3, %s207
      %s209 = smul.u32 2, %s19
      %v211 = vld [vmem:[%s0] sm:$0xf]
      %v212 = vld [vmem:[%s198] sm:$0xf]
      %v213 = vld [vmem:[%s1] sm:$0xff]
      %215 = vset.pattern.permute.xlu0 0
      %216 = vperm.xlu0 %215, %v213
      %v217 = vpop.permute.xlu0 %216
      %220 = vst [vmem:[#allocation1] ss:$4 sm:$0xff] %v212
      %v221 = vld.sshfl [vmem:[#allocation1] sm:$0xff pattern:$0x73625140]
      %v222 = vld.sshfl [vmem:[#allocation1 + $0x8] sm:$0xff pattern:$0x73625140]
      %vm223 = vcmask 31744
      %v225 = vsel %vm223, %v211, 0
      %vm227 = vcmask 1041408
      %v228 = vsel %vm227, %v221, 0
      %v230 = vsel %vm227, %v222, 0
      %232 = vmatpush.bf16.msra.mxu0 0
      %233 = vmatpush.bf16.msra.mxu0 0
      %234 = vmatpush.bf16.msra.mxu0 0
      %235 = vmatpush.bf16.msra.mxu0 0
      %236 = vmatpush.bf16.msra.mxu0 0
      %237 = vmatpush.bf16.msra.mxu0 0
      %238 = vmatpush.bf16.msra.mxu0 0
      %239 = vmatpush.bf16.msra.mxu0 %v228
      %240 = vmatmul.bf16.gmra.mxu0 %v225
      %v241 = vpop.f32.mrf.mxu0
      %v242 = vadd.f32 %v217, %v241
      %v243 = vpop.f32.mrf.mxu0
      %244 = vdwg.mxu0
      %245 = vmatpush.bf16.msra.mxu0 0
      %246 = vmatpush.bf16.msra.mxu0 0
      %247 = vmatpush.bf16.msra.mxu0 0
      %248 = vmatpush.bf16.msra.mxu0 0
      %249 = vmatpush.bf16.msra.mxu0 0
      %250 = vmatpush.bf16.msra.mxu0 0
      %251 = vmatpush.bf16.msra.mxu0 0
      %252 = vmatpush.bf16.msra.mxu0 %v230
      %253 = vmatmul.bf16.gmra.mxu0 %v225
      %v254 = vpop.f32.mrf.mxu0
      %v255 = vadd.f32 %v217, %v254
      %v256 = vpop.f32.mrf.mxu0
      %257 = vdwg.mxu0
      %v258 = vmul.f32 %v242, 0.5
      %v259 = vmul.f32 %v255, 0.5
      %v260 = vmul.f32 %v242, 0.70710677
      %v261 = vmul.f32 %v255, 0.70710677
      %v262 = vmul.f32 %v260, %v260
      %v263 = vmin.f32 16.0, %v262
      %v264 = vmul.f32 %v263, 2.1237322e-06
      %v265 = vadd.f32 %v264, 0.00028619796
      %v266 = vmul.f32 %v263, %v265
      %v267 = vadd.f32 %v266, 0.0036580483
      %v268 = vmul.f32 %v263, %v267
      %v269 = vadd.f32 %v268, 0.05243302
      %v270 = vmul.f32 %v263, %v269
      %v271 = vadd.f32 %v270, 0.18741608
      %v272 = vmul.f32 %v263, %v271
      %v273 = vadd.f32 %v272, 1.1283791
      %v274 = vmul.f32 %v260, %v273
      %v275 = vmul.f32 %v263, 3.8918573e-05
      %v276 = vadd.f32 %v275, 0.001143296
      %v277 = vmul.f32 %v263, %v276
      %v278 = vadd.f32 %v277, 0.014752088
      %v279 = vmul.f32 %v263, %v278
      %v280 = vadd.f32 %v279, 0.112945676
      %v281 = vmul.f32 %v263, %v280
      %v282 = vadd.f32 %v281, 0.4994258
      %v283 = vmul.f32 %v263, %v282
      %v284 = vadd.f32 %v283, 1.0
      %v285 = vrcp.pop %v284
      %v286 = vmul.f32 %v284, %v285
      %v287 = vsub.f32 1.0, %v286
      %v288 = vmul.f32 %v285, %v287
      %v289 = vadd.f32 %v285, %v288
      %vm290 = vweird.f32 %v284
      %vm291 = vweird.f32 %v285
      %vm292 = vmor %vm290, %vm291
      %v293 = vsel %vm292, %v285, %v289
      %v294 = vand.u32 2147483647, %v284
      %vm295 = vcmp.eq.f32.partialorder %v294, 8.507059e+37
      %v296 = vand.u32 %v284, 2147483648
      %v297 = vor.u32 1.1754944e-38, %v296
      %v298 = vsel %vm295, %v297, %v293
      %v299 = vmul.f32 %v274, %v298
      %v300 = vmin.f32 %v299, 1.0
      %v301 = vmax.f32 %v300, -1.0
      %v302 = vmul.f32 %v261, %v261
      %v303 = vmin.f32 16.0, %v302
      %v304 = vmul.f32 %v303, 2.1237322e-06
      %v305 = vadd.f32 %v304, 0.00028619796
      %v306 = vmul.f32 %v303, %v305
      %v307 = vadd.f32 %v306, 0.0036580483
      %v308 = vmul.f32 %v303, %v307
      %v309 = vadd.f32 %v308, 0.05243302
      %v310 = vmul.f32 %v303, %v309
      %v311 = vadd.f32 %v310, 0.18741608
      %v312 = vmul.f32 %v303, %v311
      %v313 = vadd.f32 %v312, 1.1283791
      %v314 = vmul.f32 %v261, %v313
      %v315 = vmul.f32 %v303, 3.8918573e-05
      %v316 = vadd.f32 %v315, 0.001143296
      %v317 = vmul.f32 %v303, %v316
      %v318 = vadd.f32 %v317, 0.014752088
      %v319 = vmul.f32 %v303, %v318
      %v320 = vadd.f32 %v319, 0.112945676
      %v321 = vmul.f32 %v303, %v320
      %v322 = vadd.f32 %v321, 0.4994258
      %v323 = vmul.f32 %v303, %v322
      %v324 = vadd.f32 %v323, 1.0
      %v325 = vrcp.pop %v324
      %v326 = vmul.f32 %v324, %v325
      %v327 = vsub.f32 1.0, %v326
      %v328 = vmul.f32 %v325, %v327
      %v329 = vadd.f32 %v325, %v328
      %vm330 = vweird.f32 %v324
      %vm331 = vweird.f32 %v325
      %vm332 = vmor %vm330, %vm331
      %v333 = vsel %vm332, %v325, %v329
      %v334 = vand.u32 2147483647, %v324
      %vm335 = vcmp.eq.f32.partialorder %v334, 8.507059e+37
      %v336 = vand.u32 %v324, 2147483648
      %v337 = vor.u32 1.1754944e-38, %v336
      %v338 = vsel %vm335, %v337, %v333
      %v339 = vmul.f32 %v314, %v338
      %v340 = vmin.f32 %v339, 1.0
      %v341 = vmax.f32 %v340, -1.0
      %v342 = vadd.f32 %v301, 1.0
      %v343 = vadd.f32 %v341, 1.0
      %v344 = vmul.f32 %v258, %v342
      %v345 = vmul.f32 %v259, %v343
      %346 = vst [vmem:[%s208] sm:$0xff] %v344
      %347 = vst [vmem:[%s208 + $0x8] sm:$0xff] %v345
      %s348 = smul.u32 2, %s19
      %p349 = scmp.lt.s32.totalorder %s18, 1
      %s350 = scalar_select %p349, %s18, 1
      %p351 = scmp.lt.s32.totalorder %s348, 1
      %s352 = scalar_select %p351, %s348, 1
      %s353 = smul.addr %s350, 2
      %s354 = sadd.s32 %s352, %s353
      %s355 = smul.addr %s354, 8
      %s356 = scalar_lea.vmem %s3, %s355
      // Predicated region
      $region33: #{a_call__.1} parent=31 // pred_check
        %p357 = pneg %p116
      $region34: #{a_call__.1} parent=31 // pred_check_branch
        %359 = sbr.rel (%p357) target = $region36
      $region35: #{a_call__.1} parent=31 // pred_region
        %s360 = smul.u32 2, %s19
      $region36: #{a_call__.1} parent=31 // pred_fallthru
        _
    $region32: #{a_call__.1} parent=5 // pred_fallthru
      _
    %p361 = scmp.le.s32.totalorder 2, %s9
    // Predicated region
    $region37: #{a_call__.1} parent=5 // pred_check
      %p362 = pneg %p361
    $region38: #{a_call__.1} parent=5 // pred_check_branch
      %364 = sbr.rel (%p362) target = $region40
    $region39: #{a_call__.1} parent=5 // pred_region
      %s365 = ssub.s32 %s9, 2
      // Predicated region
      $region41: #{a_call__.1} parent=39 // pred_check
        %p366 = pneg %p122
      $region42: #{a_call__.1} parent=39 // pred_check_branch
        %368 = sbr.rel (%p366) target = $region44
      $region43: #{a_call__.1} parent=39 // pred_region
        %s369 = smul.u32 2, %s21
        %p370 = scmp.lt.s32.totalorder %s20, 1
        %s371 = scalar_select %p370, %s20, 1
        %p372 = scmp.lt.s32.totalorder %s369, 1
        %s373 = scalar_select %p372, %s369, 1
        %s374 = smul.addr %s371, 2
        %s375 = sadd.s32 %s373, %s374
        %s376 = smul.addr %s375, 8
        %s377 = scalar_lea.vmem %s3, %s376
      $region44: #{a_call__.1} parent=39 // pred_fallthru
        _
    $region40: #{a_call__.1} parent=5 // pred_fallthru
      _
  $region6: #{a_call__.1} parent=0 // loop_footer
    %s13 = sadd.s32 1, %s9
  $region7: #{a_call__.1} parent=0 // loop_footer_branch
    %8 = sbr.rel target = $region3
  $region8: #{a_call__.1} parent=0 // loop_exit
    _

</llo_original>
